<compile_context>
chip_gen: v5e
topology: v5e:2x2
jax: 0.10.0
libtpu: 0.0.40
codegen_flags: <defaults>
</compile_context>

<pallas_src>
import functools

import jax
import jax.numpy as jnp
from jax.experimental import pallas as pl
from jax.experimental.pallas import tpu as pltpu


def _round_up(x, m):
    return ((x + m - 1) // m) * m


def _vae_kernel(latent_dim,
                x_ref,
                w1_ref, b1_ref,
                w2_ref, b2_ref,
                wml_ref, bml_ref,
                w4_ref, b4_ref,
                w5_ref, b5_ref,
                w6_ref, b6_ref,
                eps_ref,
                recon_ref, stats_ref):
    f32 = jnp.float32
    bf16 = jnp.bfloat16

    x = x_ref[...]  # (TB, input_dim) bf16

    # ---- encode ----
    h1 = jnp.maximum(
        jnp.dot(x, w1_ref[...], preferred_element_type=f32) + b1_ref[...], 0.0)
    h2 = jnp.maximum(
        jnp.dot(h1.astype(bf16), w2_ref[...], preferred_element_type=f32)
        + b2_ref[...], 0.0)

    # Fused mu|logvar projection (lane-padded to a multiple of 128 columns).
    stats = (jnp.dot(h2.astype(bf16), wml_ref[...], preferred_element_type=f32)
             + bml_ref[...])                         # (TB, stats_dim) f32

    mu = stats[:, :latent_dim]
    logvar = stats[:, latent_dim:2 * latent_dim]

    # ---- reparameterize (kept in f32; cheap and v5e has no bf16 VPU/EUP) ----
    std = jnp.exp(0.5 * logvar)
    z = mu + eps_ref[...] * std                      # (TB, latent_dim) f32

    # ---- decode ----
    h3 = jnp.maximum(
        jnp.dot(z.astype(bf16), w4_ref[...], preferred_element_type=f32)
        + b4_ref[...], 0.0)
    h4 = jnp.maximum(
        jnp.dot(h3.astype(bf16), w5_ref[...], preferred_element_type=f32)
        + b5_ref[...], 0.0)
    recon = (jnp.dot(h4.astype(bf16), w6_ref[...], preferred_element_type=f32)
             + b6_ref[...])

    recon_ref[...] = recon
    stats_ref[...] = stats


def vae_forward(x, params, eps, *, batch_tile=512):
    """VAE forward pass via one gridded Pallas call.

    x:      (B, input_dim) float32
    params: dict of weights (in, out) and biases (1, out), float32
    eps:    (B, latent_dim) float32 standard-normal noise
    Returns (recon_x, mu, logvar), all float32.
    """
    B, input_dim = x.shape
    latent_dim = params["w31"].shape[1]
    bf16 = jnp.bfloat16

    # ---- parameter preprocessing (one-off) ----
    stats_dim = _round_up(max(2 * latent_dim, 128), 128)
    wml = jnp.concatenate([params["w31"], params["w32"]], axis=1)
    bml = jnp.concatenate([params["b31"], params["b32"]], axis=1)
    pad_cols = stats_dim - 2 * latent_dim
    wml = jnp.pad(wml, ((0, 0), (0, pad_cols))).astype(bf16)
    bml = jnp.pad(bml, ((0, 0), (0, pad_cols)))

    w1 = params["w1"].astype(bf16)
    w2 = params["w2"].astype(bf16)
    w4 = params["w4"].astype(bf16)
    w5 = params["w5"].astype(bf16)
    w6 = params["w6"].astype(bf16)
    b1, b2, b4, b5, b6 = (params[k] for k in ("b1", "b2", "b4", "b5", "b6"))

    # ---- batch tiling: pad B to a multiple of the tile, strip at the end ----
    tb = batch_tile if B >= batch_tile else _round_up(B, 8)
    Bp = _round_up(B, tb)
    x_p = jnp.pad(x, ((0, Bp - B), (0, 0))).astype(bf16)
    eps_p = jnp.pad(eps, ((0, Bp - B), (0, 0))).astype(jnp.float32)

    grid = (Bp // tb,)

    def row_spec(ncols):
        return pl.BlockSpec((tb, ncols), lambda i: (i, 0))

    def const_spec(arr):
        # Whole-array block, same block index every step -> fetched once,
        # stays resident in VMEM across the batch grid.
        return pl.BlockSpec(arr.shape, lambda i: (0, 0))

    in_specs = [
        row_spec(input_dim),                      # x tile
        const_spec(w1), const_spec(b1),
        const_spec(w2), const_spec(b2),
        const_spec(wml), const_spec(bml),
        const_spec(w4), const_spec(b4),
        const_spec(w5), const_spec(b5),
        const_spec(w6), const_spec(b6),
        row_spec(latent_dim),                     # eps tile
    ]
    out_specs = (row_spec(input_dim), row_spec(stats_dim))
    out_shape = (
        jax.ShapeDtypeStruct((Bp, input_dim), jnp.float32),   # recon
        jax.ShapeDtypeStruct((Bp, stats_dim), jnp.float32),   # [mu | logvar | 0-pad]
    )

    recon_p, stats_p = pl.pallas_call(
        functools.partial(_vae_kernel, latent_dim),
        grid=grid,
        in_specs=in_specs,
        out_specs=out_specs,
        out_shape=out_shape,
        compiler_params=pltpu.CompilerParams(
            dimension_semantics=("parallel",)),
    )(x_p, w1, b1, w2, b2, wml, bml, w4, b4, w5, b5, w6, b6, eps_p)

    recon = recon_p[:B]
    mu = stats_p[:B, :latent_dim]
    logvar = stats_p[:B, latent_dim:2 * latent_dim]
    return recon, mu, logvar


def init_params(key, input_dim, first_layer_dim, second_layer_dim, latent_dim):
    """Deterministic init mirroring nn.Linear shapes (weights stored transposed: (in, out))."""
    dims = {
        "1":  (input_dim, first_layer_dim),
        "2":  (first_layer_dim, second_layer_dim),
        "31": (second_layer_dim, latent_dim),
        "32": (second_layer_dim, latent_dim),
        "4":  (latent_dim, second_layer_dim),
        "5":  (second_layer_dim, first_layer_dim),
        "6":  (first_layer_dim, input_dim),
    }
    params = {}
    keys = jax.random.split(key, 2 * len(dims))
    for i, (name, (fan_in, fan_out)) in enumerate(dims.items()):
        bound = 1.0 / jnp.sqrt(jnp.float32(fan_in))
        wk, bk = keys[2 * i], keys[2 * i + 1]
        params[f"w{name}"] = jax.random.uniform(
            wk, (fan_in, fan_out), jnp.float32, minval=-bound, maxval=bound)
        params[f"b{name}"] = jax.random.uniform(
            bk, (1, fan_out), jnp.float32, minval=-bound, maxval=bound)
    return params


if __name__ == "__main__":
    # Small, forward-consistent shapes.
    B = 8
    input_dim = 256
    first_layer_dim = 128
    second_layer_dim = 64
    latent_dim = 32

    key = jax.random.PRNGKey(0)
    k_x, k_p, k_eps = jax.random.split(key, 3)

    x = jax.random.normal(k_x, (B, input_dim), dtype=jnp.float32)
    params = init_params(k_p, input_dim, first_layer_dim, second_layer_dim, latent_dim)
    eps = jax.random.normal(k_eps, (B, latent_dim), dtype=jnp.float32)

    recon_x, mu, logvar = vae_forward(x, params, eps)
    jax.block_until_ready((recon_x, mu, logvar))

    # Pure-JAX reference applying the same bf16-matmul / f32-accumulate recipe.
    def ref_forward(x, p, eps):
        bf = lambda a: a.astype(jnp.bfloat16)
        dot = lambda a, b: jnp.dot(bf(a), bf(b), preferred_element_type=jnp.float32)
        h1 = jax.nn.relu(dot(x, p["w1"]) + p["b1"])
        h2 = jax.nn.relu(dot(h1, p["w2"]) + p["b2"])
        mu = dot(h2, p["w31"]) + p["b31"]
        logvar = dot(h2, p["w32"]) + p["b32"]
        z = mu + eps * jnp.exp(0.5 * logvar)
        h3 = jax.nn.relu(dot(z, p["w4"]) + p["b4"])
        h4 = jax.nn.relu(dot(h3, p["w5"]) + p["b5"])
        return dot(h4, p["w6"]) + p["b6"], mu, logvar

    r_ref, mu_ref, lv_ref = ref_forward(x, params, eps)
    assert recon_x.shape == (B, input_dim)
    assert mu.shape == (B, latent_dim) and logvar.shape == (B, latent_dim)
    assert jnp.allclose(recon_x, r_ref, atol=5e-3, rtol=5e-3)
    assert jnp.allclose(mu, mu_ref, atol=5e-3, rtol=5e-3)
    assert jnp.allclose(logvar, lv_ref, atol=5e-3, rtol=5e-3)

    print("KERNEL_OK")
</pallas_src>

<mosaic_0001>
module attributes {stable_mosaic.version = 11 : i64} {
  func.func @_vae_kernel(%arg0: i32, %arg1: memref<8x256xbf16, #tpu.memory_space<vmem>>, %arg2: memref<256x128xbf16, #tpu.memory_space<vmem>>, %arg3: memref<1x128xf32, #tpu.memory_space<vmem>>, %arg4: memref<128x64xbf16, #tpu.memory_space<vmem>>, %arg5: memref<1x64xf32, #tpu.memory_space<vmem>>, %arg6: memref<64x128xbf16, #tpu.memory_space<vmem>>, %arg7: memref<1x128xf32, #tpu.memory_space<vmem>>, %arg8: memref<32x64xbf16, #tpu.memory_space<vmem>>, %arg9: memref<1x64xf32, #tpu.memory_space<vmem>>, %arg10: memref<64x128xbf16, #tpu.memory_space<vmem>>, %arg11: memref<1x128xf32, #tpu.memory_space<vmem>>, %arg12: memref<128x256xbf16, #tpu.memory_space<vmem>>, %arg13: memref<1x256xf32, #tpu.memory_space<vmem>>, %arg14: memref<8x32xf32, #tpu.memory_space<vmem>>, %arg15: memref<8x256xf32, #tpu.memory_space<vmem>>, %arg16: memref<8x128xf32, #tpu.memory_space<vmem>>) attributes {dimension_semantics = [#tpu.dimension_semantics<parallel>], iteration_bounds = array<i64: 1>, scalar_prefetch = 0 : i64, scratch_operands = 0 : i64, tpu.core_type = #tpu.core_type<tc>, window_params = [{transform_indices = @transform_0, window_bounds = array<i64: 8, 256>}, {pipeline_mode = #tpu.pipeline_mode<synchronous>, transform_indices = @transform_1, window_bounds = array<i64: 256, 128>}, {pipeline_mode = #tpu.pipeline_mode<synchronous>, transform_indices = @transform_2, window_bounds = array<i64: 1, 128>}, {pipeline_mode = #tpu.pipeline_mode<synchronous>, transform_indices = @transform_3, window_bounds = array<i64: 128, 64>}, {pipeline_mode = #tpu.pipeline_mode<synchronous>, transform_indices = @transform_4, window_bounds = array<i64: 1, 64>}, {pipeline_mode = #tpu.pipeline_mode<synchronous>, transform_indices = @transform_5, window_bounds = array<i64: 64, 128>}, {pipeline_mode = #tpu.pipeline_mode<synchronous>, transform_indices = @transform_6, window_bounds = array<i64: 1, 128>}, {pipeline_mode = #tpu.pipeline_mode<synchronous>, transform_indices = @transform_7, window_bounds = array<i64: 32, 64>}, {pipeline_mode = #tpu.pipeline_mode<synchronous>, transform_indices = @transform_8, window_bounds = array<i64: 1, 64>}, {pipeline_mode = #tpu.pipeline_mode<synchronous>, transform_indices = @transform_9, window_bounds = array<i64: 64, 128>}, {pipeline_mode = #tpu.pipeline_mode<synchronous>, transform_indices = @transform_10, window_bounds = array<i64: 1, 128>}, {pipeline_mode = #tpu.pipeline_mode<synchronous>, transform_indices = @transform_11, window_bounds = array<i64: 128, 256>}, {pipeline_mode = #tpu.pipeline_mode<synchronous>, transform_indices = @transform_12, window_bounds = array<i64: 1, 256>}, {transform_indices = @transform_13, window_bounds = array<i64: 8, 32>}, {transform_indices = @transform_14, window_bounds = array<i64: 8, 256>}, {transform_indices = @transform_15, window_bounds = array<i64: 8, 128>}]} {
    %c0 = arith.constant 0 : index
    %c0_0 = arith.constant 0 : index
    %0 = vector.load %arg1[%c0, %c0_0] : memref<8x256xbf16, #tpu.memory_space<vmem>>, vector<8x256xbf16>
    %c0_1 = arith.constant 0 : index
    %c0_2 = arith.constant 0 : index
    %1 = vector.load %arg2[%c0_1, %c0_2] : memref<256x128xbf16, #tpu.memory_space<vmem>>, vector<256x128xbf16>
    %cst = arith.constant dense<0.000000e+00> : vector<8x128xf32>
    %2 = tpu.matmul %0, %1, %cst {dimension_numbers = #tpu.dot_dimension_numbers<[1], [0], [0], [1], [0, 0, 1, 1], [], []>} : vector<8x256xbf16>, vector<256x128xbf16>, vector<8x128xf32> -> vector<8x128xf32>
    %c0_3 = arith.constant 0 : index
    %c0_4 = arith.constant 0 : index
    %3 = vector.load %arg3[%c0_3, %c0_4] : memref<1x128xf32, #tpu.memory_space<vmem>>, vector<1x128xf32>
    %4 = vector.broadcast %3 : vector<1x128xf32> to vector<8x128xf32>
    %5 = arith.addf %2, %4 : vector<8x128xf32>
    %cst_5 = arith.constant 0.000000e+00 : f32
    %6 = vector.broadcast %cst_5 : f32 to vector<8x128xf32>
    %7 = arith.maximumf %5, %6 : vector<8x128xf32>
    %8 = arith.truncf %7 : vector<8x128xf32> to vector<8x128xbf16>
    %c0_6 = arith.constant 0 : index
    %c0_7 = arith.constant 0 : index
    %9 = vector.load %arg4[%c0_6, %c0_7] : memref<128x64xbf16, #tpu.memory_space<vmem>>, vector<128x64xbf16>
    %cst_8 = arith.constant dense<0.000000e+00> : vector<8x64xf32>
    %10 = tpu.matmul %8, %9, %cst_8 {dimension_numbers = #tpu.dot_dimension_numbers<[1], [0], [0], [1], [0, 0, 1, 1], [], []>} : vector<8x128xbf16>, vector<128x64xbf16>, vector<8x64xf32> -> vector<8x64xf32>
    %c0_9 = arith.constant 0 : index
    %c0_10 = arith.constant 0 : index
    %11 = vector.load %arg5[%c0_9, %c0_10] : memref<1x64xf32, #tpu.memory_space<vmem>>, vector<1x64xf32>
    %12 = vector.broadcast %11 : vector<1x64xf32> to vector<8x64xf32>
    %13 = arith.addf %10, %12 : vector<8x64xf32>
    %cst_11 = arith.constant 0.000000e+00 : f32
    %14 = vector.broadcast %cst_11 : f32 to vector<8x64xf32>
    %15 = arith.maximumf %13, %14 : vector<8x64xf32>
    %16 = arith.truncf %15 : vector<8x64xf32> to vector<8x64xbf16>
    %c0_12 = arith.constant 0 : index
    %c0_13 = arith.constant 0 : index
    %17 = vector.load %arg6[%c0_12, %c0_13] : memref<64x128xbf16, #tpu.memory_space<vmem>>, vector<64x128xbf16>
    %cst_14 = arith.constant dense<0.000000e+00> : vector<8x128xf32>
    %18 = tpu.matmul %16, %17, %cst_14 {dimension_numbers = #tpu.dot_dimension_numbers<[1], [0], [0], [1], [0, 0, 1, 1], [], []>} : vector<8x64xbf16>, vector<64x128xbf16>, vector<8x128xf32> -> vector<8x128xf32>
    %c0_15 = arith.constant 0 : index
    %c0_16 = arith.constant 0 : index
    %19 = vector.load %arg7[%c0_15, %c0_16] : memref<1x128xf32, #tpu.memory_space<vmem>>, vector<1x128xf32>
    %20 = vector.broadcast %19 : vector<1x128xf32> to vector<8x128xf32>
    %21 = arith.addf %18, %20 : vector<8x128xf32>
    %22 = vector.extract_strided_slice %21 {offsets = [0, 0], sizes = [8, 32], strides = [1, 1]} : vector<8x128xf32> to vector<8x32xf32>
    %23 = vector.extract_strided_slice %21 {offsets = [0, 32], sizes = [8, 32], strides = [1, 1]} : vector<8x128xf32> to vector<8x32xf32>
    %cst_17 = arith.constant 5.000000e-01 : f32
    %24 = vector.broadcast %cst_17 : f32 to vector<8x32xf32>
    %25 = arith.mulf %24, %23 : vector<8x32xf32>
    %26 = math.exp %25 : vector<8x32xf32>
    %c0_18 = arith.constant 0 : index
    %c0_19 = arith.constant 0 : index
    %27 = vector.load %arg14[%c0_18, %c0_19] : memref<8x32xf32, #tpu.memory_space<vmem>>, vector<8x32xf32>
    %28 = arith.mulf %27, %26 : vector<8x32xf32>
    %29 = arith.addf %22, %28 : vector<8x32xf32>
    %30 = arith.truncf %29 : vector<8x32xf32> to vector<8x32xbf16>
    %c0_20 = arith.constant 0 : index
    %c0_21 = arith.constant 0 : index
    %31 = vector.load %arg8[%c0_20, %c0_21] : memref<32x64xbf16, #tpu.memory_space<vmem>>, vector<32x64xbf16>
    %cst_22 = arith.constant dense<0.000000e+00> : vector<8x64xf32>
    %32 = tpu.matmul %30, %31, %cst_22 {dimension_numbers = #tpu.dot_dimension_numbers<[1], [0], [0], [1], [0, 0, 1, 1], [], []>} : vector<8x32xbf16>, vector<32x64xbf16>, vector<8x64xf32> -> vector<8x64xf32>
    %c0_23 = arith.constant 0 : index
    %c0_24 = arith.constant 0 : index
    %33 = vector.load %arg9[%c0_23, %c0_24] : memref<1x64xf32, #tpu.memory_space<vmem>>, vector<1x64xf32>
    %34 = vector.broadcast %33 : vector<1x64xf32> to vector<8x64xf32>
    %35 = arith.addf %32, %34 : vector<8x64xf32>
    %cst_25 = arith.constant 0.000000e+00 : f32
    %36 = vector.broadcast %cst_25 : f32 to vector<8x64xf32>
    %37 = arith.maximumf %35, %36 : vector<8x64xf32>
    %38 = arith.truncf %37 : vector<8x64xf32> to vector<8x64xbf16>
    %c0_26 = arith.constant 0 : index
    %c0_27 = arith.constant 0 : index
    %39 = vector.load %arg10[%c0_26, %c0_27] : memref<64x128xbf16, #tpu.memory_space<vmem>>, vector<64x128xbf16>
    %cst_28 = arith.constant dense<0.000000e+00> : vector<8x128xf32>
    %40 = tpu.matmul %38, %39, %cst_28 {dimension_numbers = #tpu.dot_dimension_numbers<[1], [0], [0], [1], [0, 0, 1, 1], [], []>} : vector<8x64xbf16>, vector<64x128xbf16>, vector<8x128xf32> -> vector<8x128xf32>
    %c0_29 = arith.constant 0 : index
    %c0_30 = arith.constant 0 : index
    %41 = vector.load %arg11[%c0_29, %c0_30] : memref<1x128xf32, #tpu.memory_space<vmem>>, vector<1x128xf32>
    %42 = vector.broadcast %41 : vector<1x128xf32> to vector<8x128xf32>
    %43 = arith.addf %40, %42 : vector<8x128xf32>
    %cst_31 = arith.constant 0.000000e+00 : f32
    %44 = vector.broadcast %cst_31 : f32 to vector<8x128xf32>
    %45 = arith.maximumf %43, %44 : vector<8x128xf32>
    %46 = arith.truncf %45 : vector<8x128xf32> to vector<8x128xbf16>
    %c0_32 = arith.constant 0 : index
    %c0_33 = arith.constant 0 : index
    %47 = vector.load %arg12[%c0_32, %c0_33] : memref<128x256xbf16, #tpu.memory_space<vmem>>, vector<128x256xbf16>
    %cst_34 = arith.constant dense<0.000000e+00> : vector<8x256xf32>
    %48 = tpu.matmul %46, %47, %cst_34 {dimension_numbers = #tpu.dot_dimension_numbers<[1], [0], [0], [1], [0, 0, 1, 1], [], []>} : vector<8x128xbf16>, vector<128x256xbf16>, vector<8x256xf32> -> vector<8x256xf32>
    %c0_35 = arith.constant 0 : index
    %c0_36 = arith.constant 0 : index
    %49 = vector.load %arg13[%c0_35, %c0_36] : memref<1x256xf32, #tpu.memory_space<vmem>>, vector<1x256xf32>
    %50 = vector.broadcast %49 : vector<1x256xf32> to vector<8x256xf32>
    %51 = arith.addf %48, %50 : vector<8x256xf32>
    %c0_37 = arith.constant 0 : index
    %c0_38 = arith.constant 0 : index
    %52 = vector.load %arg15[%c0_37, %c0_38] : memref<8x256xf32, #tpu.memory_space<vmem>>, vector<8x256xf32>
    tpu.vector_store %arg15[%c0_37, %c0_38], %51 {strides = array<i32>} : memref<8x256xf32, #tpu.memory_space<vmem>>, vector<8x256xf32>,
    %c0_39 = arith.constant 0 : index
    %c0_40 = arith.constant 0 : index
    %53 = vector.load %arg16[%c0_39, %c0_40] : memref<8x128xf32, #tpu.memory_space<vmem>>, vector<8x128xf32>
    tpu.vector_store %arg16[%c0_39, %c0_40], %21 {strides = array<i32>} : memref<8x128xf32, #tpu.memory_space<vmem>>, vector<8x128xf32>,
    return
  }
  func.func @transform_0(%arg0: i32) -> (i32, i32) {
    %c0_i32 = arith.constant 0 : i32
    %c0_i32_0 = arith.constant 0 : i32
    return %arg0, %c0_i32 : i32, i32
  }
  func.func @transform_1(%arg0: i32) -> (i32, i32) {
    %c0_i32 = arith.constant 0 : i32
    %c0_i32_0 = arith.constant 0 : i32
    %c0_i32_1 = arith.constant 0 : i32
    return %c0_i32, %c0_i32_0 : i32, i32
  }
  func.func @transform_2(%arg0: i32) -> (i32, i32) {
    %c0_i32 = arith.constant 0 : i32
    %c0_i32_0 = arith.constant 0 : i32
    %c0_i32_1 = arith.constant 0 : i32
    return %c0_i32, %c0_i32_0 : i32, i32
  }
  func.func @transform_3(%arg0: i32) -> (i32, i32) {
    %c0_i32 = arith.constant 0 : i32
    %c0_i32_0 = arith.constant 0 : i32
    %c0_i32_1 = arith.constant 0 : i32
    return %c0_i32, %c0_i32_0 : i32, i32
  }
  func.func @transform_4(%arg0: i32) -> (i32, i32) {
    %c0_i32 = arith.constant 0 : i32
    %c0_i32_0 = arith.constant 0 : i32
    %c0_i32_1 = arith.constant 0 : i32
    return %c0_i32, %c0_i32_0 : i32, i32
  }
  func.func @transform_5(%arg0: i32) -> (i32, i32) {
    %c0_i32 = arith.constant 0 : i32
    %c0_i32_0 = arith.constant 0 : i32
    %c0_i32_1 = arith.constant 0 : i32
    return %c0_i32, %c0_i32_0 : i32, i32
  }
  func.func @transform_6(%arg0: i32) -> (i32, i32) {
    %c0_i32 = arith.constant 0 : i32
    %c0_i32_0 = arith.constant 0 : i32
    %c0_i32_1 = arith.constant 0 : i32
    return %c0_i32, %c0_i32_0 : i32, i32
  }
  func.func @transform_7(%arg0: i32) -> (i32, i32) {
    %c0_i32 = arith.constant 0 : i32
    %c0_i32_0 = arith.constant 0 : i32
    %c0_i32_1 = arith.constant 0 : i32
    return %c0_i32, %c0_i32_0 : i32, i32
  }
  func.func @transform_8(%arg0: i32) -> (i32, i32) {
    %c0_i32 = arith.constant 0 : i32
    %c0_i32_0 = arith.constant 0 : i32
    %c0_i32_1 = arith.constant 0 : i32
    return %c0_i32, %c0_i32_0 : i32, i32
  }
  func.func @transform_9(%arg0: i32) -> (i32, i32) {
    %c0_i32 = arith.constant 0 : i32
    %c0_i32_0 = arith.constant 0 : i32
    %c0_i32_1 = arith.constant 0 : i32
    return %c0_i32, %c0_i32_0 : i32, i32
  }
  func.func @transform_10(%arg0: i32) -> (i32, i32) {
    %c0_i32 = arith.constant 0 : i32
    %c0_i32_0 = arith.constant 0 : i32
    %c0_i32_1 = arith.constant 0 : i32
    return %c0_i32, %c0_i32_0 : i32, i32
  }
  func.func @transform_11(%arg0: i32) -> (i32, i32) {
    %c0_i32 = arith.constant 0 : i32
    %c0_i32_0 = arith.constant 0 : i32
    %c0_i32_1 = arith.constant 0 : i32
    return %c0_i32, %c0_i32_0 : i32, i32
  }
  func.func @transform_12(%arg0: i32) -> (i32, i32) {
    %c0_i32 = arith.constant 0 : i32
    %c0_i32_0 = arith.constant 0 : i32
    %c0_i32_1 = arith.constant 0 : i32
    return %c0_i32, %c0_i32_0 : i32, i32
  }
  func.func @transform_13(%arg0: i32) -> (i32, i32) {
    %c0_i32 = arith.constant 0 : i32
    %c0_i32_0 = arith.constant 0 : i32
    return %arg0, %c0_i32 : i32, i32
  }
  func.func @transform_14(%arg0: i32) -> (i32, i32) {
    %c0_i32 = arith.constant 0 : i32
    %c0_i32_0 = arith.constant 0 : i32
    return %arg0, %c0_i32 : i32, i32
  }
  func.func @transform_15(%arg0: i32) -> (i32, i32) {
    %c0_i32 = arith.constant 0 : i32
    %c0_i32_0 = arith.constant 0 : i32
    return %arg0, %c0_i32 : i32, i32
  }
}

</mosaic_0001>

<llo_original>
// kernel: tpu_custom_call.1
$region0: #{tpu_custom_call.1}
  #allocation0 [shape = 'u32[]', space=smem, size = 0x4, offset = 0x4, fixed_abs, tag = 'smem constant byte address 0x4 - core index']
  #allocation1 [shape = 'u32[72,128]{1,0:T(1,128)}', space=vmem, size = 0x9000, scoped, tag = 'internal scratch']
  %s0 = inlined_call_operand.vmem [shape: bf16[8,256], index: 0, kind: input, shape index: {}]
  %s1 = inlined_call_operand.hbm [shape: bf16[256,128], index: 1, kind: input, shape index: {}]
  %s2 = inlined_call_operand.vmem [shape: f32[1,128], index: 2, kind: input, shape index: {}]
  %s3 = inlined_call_operand.vmem [shape: bf16[128,64], index: 3, kind: input, shape index: {}]
  %s4 = inlined_call_operand.hbm [shape: f32[1,64], index: 4, kind: input, shape index: {}]
  %s5 = inlined_call_operand.vmem [shape: bf16[64,128], index: 5, kind: input, shape index: {}]
  %s6 = inlined_call_operand.vmem [shape: f32[1,128], index: 6, kind: input, shape index: {}]
  %s7 = inlined_call_operand.vmem [shape: bf16[32,64], index: 7, kind: input, shape index: {}]
  %s8 = inlined_call_operand.vmem [shape: f32[1,64], index: 8, kind: input, shape index: {}]
  %s9 = inlined_call_operand.vmem [shape: bf16[64,128], index: 9, kind: input, shape index: {}]
  %s10 = inlined_call_operand.vmem [shape: f32[1,128], index: 10, kind: input, shape index: {}]
  %s11 = inlined_call_operand.hbm [shape: bf16[128,256], index: 11, kind: input, shape index: {}]
  %s12 = inlined_call_operand.vmem [shape: f32[1,256], index: 12, kind: input, shape index: {}]
  %s13 = inlined_call_operand.vmem [shape: f32[8,32], index: 13, kind: input, shape index: {}]
  %s14 = inlined_call_operand.hbm [shape: f32[8,256], index: 14, kind: output, shape index: {0}]
  %s15 = inlined_call_operand.hbm [shape: f32[8,128], index: 15, kind: output, shape index: {1}]
  %16 = xla_tuple %s14, %s15
  %s17 = sld [smem:[#allocation0]]
  $region86: #{tpu_custom_call.1} parent=0
    _
  %s19 = ssub.s32 1, %s17
  %s20 = scalar_select 0, %s19, %s17
  $region1: #{tpu_custom_call.1} parent=0
    #allocation2 [shape = 'u8[65536]{0}', space=vmem, size = 0x10000, scoped, tag = 'input window, operand 1, single buffered']
    #allocation3 [shape = 's32[1]{0}', space=sflag, size = 0x4, scoped, tag = 'scoped memory for tpu_custom_call.1']
    #allocation4 [shape = 's32[1]{0}', space=sflag, size = 0x4, scoped, tag = 'scoped memory for tpu_custom_call.1']
    #allocation5 [shape = 'u8[512]{0}', space=vmem, size = 0x400, scoped, tag = 'input window, operand 4, single buffered']
    #allocation6 [shape = 's32[1]{0}', space=sflag, size = 0x4, scoped, tag = 'scoped memory for tpu_custom_call.1']
    #allocation7 [shape = 'u8[65536]{0}', space=vmem, size = 0x10000, scoped, tag = 'input window, operand 11, single buffered']
    #allocation8 [shape = 'u8[8192]{0}', space=vmem, size = 0x2000, scoped, tag = 'output window, operand 0, single buffered']
    #allocation9 [shape = 'u8[4096]{0}', space=vmem, size = 0x1000, scoped, tag = 'output window, operand 1, single buffered']
    #allocation10 [shape = 's32[1]{0}', space=sflag, size = 0x4, scoped, tag = 'scoped memory for tpu_custom_call.1']
    %21 = vsyncpa [#allocation3], 0
    %22 = vsyncpa [#allocation6], 0
    %23 = vsyncpa [#allocation4], 0
    %24 = vsyncpa [#allocation10], 0
    // Predicated region
    $region2: #{tpu_custom_call.1} parent=1 // pred_check
      _
    $region3: #{tpu_custom_call.1} parent=1 // pred_check_branch
      %26 = sbr.rel (0) target = $region5
    $region4: #{tpu_custom_call.1} parent=1 // pred_region
      _
    $region5: #{tpu_custom_call.1} parent=1 // pred_fallthru
      _
    // Predicated region
    $region6: #{tpu_custom_call.1} parent=1 // pred_check
      _
    $region7: #{tpu_custom_call.1} parent=1 // pred_check_branch
      %28 = sbr.rel (0) target = $region9
    $region8: #{tpu_custom_call.1} parent=1 // pred_region
      %30 = vsyncadd [#allocation3], 0
      %s31 = sshll.u32 %s1, 4
      %s32 = int_to_ptr.hbm [resolvable:$true] %s31
      %s33 = sshll.u32 [#allocation2], 4
      %s34 = int_to_ptr.vmem [resolvable:$true] %s33
      %39 = dma.hbm_to_vmem [thread:$0]  %s32, 2048, %s34, [#allocation3], 64, 64, 4
    $region9: #{tpu_custom_call.1} parent=1 // pred_fallthru
      _
    // Predicated region
    $region10: #{tpu_custom_call.1} parent=1 // pred_check
      _
    $region11: #{tpu_custom_call.1} parent=1 // pred_check_branch
      %41 = sbr.rel (0) target = $region13
    $region12: #{tpu_custom_call.1} parent=1 // pred_region
      _
    $region13: #{tpu_custom_call.1} parent=1 // pred_fallthru
      _
    // Predicated region
    $region14: #{tpu_custom_call.1} parent=1 // pred_check
      _
    $region15: #{tpu_custom_call.1} parent=1 // pred_check_branch
      %43 = sbr.rel (0) target = $region17
    $region16: #{tpu_custom_call.1} parent=1 // pred_region
      _
    $region17: #{tpu_custom_call.1} parent=1 // pred_fallthru
      _
    // Predicated region
    $region18: #{tpu_custom_call.1} parent=1 // pred_check
      _
    $region19: #{tpu_custom_call.1} parent=1 // pred_check_branch
      %45 = sbr.rel (0) target = $region21
    $region20: #{tpu_custom_call.1} parent=1 // pred_region
      %47 = vsyncadd [#allocation6], 0
      %s49 = sshll.u32 %s4, 4
      %s50 = int_to_ptr.hbm [resolvable:$true] %s49
      %s51 = sshll.u32 [#allocation5], 4
      %s52 = int_to_ptr.vmem [resolvable:$true] %s51
      %54 = dma.hbm_to_vmem [thread:$0]  %s50, 16, %s52, [#allocation6]
    $region21: #{tpu_custom_call.1} parent=1 // pred_fallthru
      _
    // Predicated region
    $region22: #{tpu_custom_call.1} parent=1 // pred_check
      _
    $region23: #{tpu_custom_call.1} parent=1 // pred_check_branch
      %56 = sbr.rel (0) target = $region25
    $region24: #{tpu_custom_call.1} parent=1 // pred_region
      _
    $region25: #{tpu_custom_call.1} parent=1 // pred_fallthru
      _
    // Predicated region
    $region26: #{tpu_custom_call.1} parent=1 // pred_check
      _
    $region27: #{tpu_custom_call.1} parent=1 // pred_check_branch
      %58 = sbr.rel (0) target = $region29
    $region28: #{tpu_custom_call.1} parent=1 // pred_region
      _
    $region29: #{tpu_custom_call.1} parent=1 // pred_fallthru
      _
    // Predicated region
    $region30: #{tpu_custom_call.1} parent=1 // pred_check
      _
    $region31: #{tpu_custom_call.1} parent=1 // pred_check_branch
      %60 = sbr.rel (0) target = $region33
    $region32: #{tpu_custom_call.1} parent=1 // pred_region
      _
    $region33: #{tpu_custom_call.1} parent=1 // pred_fallthru
      _
    // Predicated region
    $region34: #{tpu_custom_call.1} parent=1 // pred_check
      _
    $region35: #{tpu_custom_call.1} parent=1 // pred_check_branch
      %62 = sbr.rel (0) target = $region37
    $region36: #{tpu_custom_call.1} parent=1 // pred_region
      _
    $region37: #{tpu_custom_call.1} parent=1 // pred_fallthru
      _
    // Predicated region
    $region38: #{tpu_custom_call.1} parent=1 // pred_check
      _
    $region39: #{tpu_custom_call.1} parent=1 // pred_check_branch
      %64 = sbr.rel (0) target = $region41
    $region40: #{tpu_custom_call.1} parent=1 // pred_region
      _
    $region41: #{tpu_custom_call.1} parent=1 // pred_fallthru
      _
    // Predicated region
    $region42: #{tpu_custom_call.1} parent=1 // pred_check
      _
    $region43: #{tpu_custom_call.1} parent=1 // pred_check_branch
      %66 = sbr.rel (0) target = $region45
    $region44: #{tpu_custom_call.1} parent=1 // pred_region
      _
    $region45: #{tpu_custom_call.1} parent=1 // pred_fallthru
      _
    // Predicated region
    $region46: #{tpu_custom_call.1} parent=1 // pred_check
      _
    $region47: #{tpu_custom_call.1} parent=1 // pred_check_branch
      %68 = sbr.rel (0) target = $region49
    $region48: #{tpu_custom_call.1} parent=1 // pred_region
      %70 = vsyncadd [#allocation6], 0
      %s71 = sshll.u32 %s11, 4
      %s72 = int_to_ptr.hbm [resolvable:$true] %s71
      %s73 = sshll.u32 [#allocation7], 4
      %s74 = int_to_ptr.vmem [resolvable:$true] %s73
      %79 = dma.hbm_to_vmem [thread:$0]  %s72, 2048, %s74, [#allocation6], 128, 128, 8
    $region49: #{tpu_custom_call.1} parent=1 // pred_fallthru
      _
    // Predicated region
    $region50: #{tpu_custom_call.1} parent=1 // pred_check
      _
    $region51: #{tpu_custom_call.1} parent=1 // pred_check_branch
      %81 = sbr.rel (0) target = $region53
    $region52: #{tpu_custom_call.1} parent=1 // pred_region
      _
    $region53: #{tpu_custom_call.1} parent=1 // pred_fallthru
      _
    // Predicated region
    $region54: #{tpu_custom_call.1} parent=1 // pred_check
      _
    $region55: #{tpu_custom_call.1} parent=1 // pred_check_branch
      %83 = sbr.rel (0) target = $region57
    $region56: #{tpu_custom_call.1} parent=1 // pred_region
      _
    $region57: #{tpu_custom_call.1} parent=1 // pred_fallthru
      _
    // Predicated region
    $region58: #{tpu_custom_call.1} parent=1 // pred_check
      _
    $region59: #{tpu_custom_call.1} parent=1 // pred_check_branch
      %85 = sbr.rel (0) target = $region61
    $region60: #{tpu_custom_call.1} parent=1 // pred_region
      %87 = dma.done [#allocation3], 2048
    $region61: #{tpu_custom_call.1} parent=1 // pred_fallthru
      _
    // Predicated region
    $region62: #{tpu_custom_call.1} parent=1 // pred_check
      _
    $region63: #{tpu_custom_call.1} parent=1 // pred_check_branch
      %89 = sbr.rel (0) target = $region65
    $region64: #{tpu_custom_call.1} parent=1 // pred_region
      %91 = dma.done [#allocation6], 16
    $region65: #{tpu_custom_call.1} parent=1 // pred_fallthru
      _
    // Predicated region
    $region66: #{tpu_custom_call.1} parent=1 // pred_check
      _
    $region67: #{tpu_custom_call.1} parent=1 // pred_check_branch
      %93 = sbr.rel (0) target = $region69
    $region68: #{tpu_custom_call.1} parent=1 // pred_region
      %95 = dma.done [#allocation6], 2048
    $region69: #{tpu_custom_call.1} parent=1 // pred_fallthru
      _
    %v97 = vld [vmem:[%s0] sm:$0xff]
    %v98 = vld [vmem:[#allocation2] sm:$0xf]
    %v99 = vld [vmem:[#allocation2 + $0x4] sm:$0xf]
    %v100 = vld [vmem:[#allocation2 + $0x8] sm:$0xf]
    %v101 = vld [vmem:[#allocation2 + $0xc] sm:$0xf]
    %v102 = vld [vmem:[#allocation2 + $0x10] sm:$0xf]
    %v103 = vld [vmem:[#allocation2 + $0x14] sm:$0xf]
    %v104 = vld [vmem:[#allocation2 + $0x18] sm:$0xf]
    %v105 = vld [vmem:[#allocation2 + $0x1c] sm:$0xf]
    %v106 = vld [vmem:[#allocation2 + $0x20] sm:$0xf]
    %v107 = vld [vmem:[#allocation2 + $0x24] sm:$0xf]
    %v108 = vld [vmem:[#allocation2 + $0x28] sm:$0xf]
    %v109 = vld [vmem:[#allocation2 + $0x2c] sm:$0xf]
    %v110 = vld [vmem:[#allocation2 + $0x30] sm:$0xf]
    %v111 = vld [vmem:[#allocation2 + $0x34] sm:$0xf]
    %v112 = vld [vmem:[#allocation2 + $0x38] sm:$0xf]
    %v113 = vld [vmem:[#allocation2 + $0x3c] sm:$0xf]
    %v114 = vld [vmem:[#allocation2 + $0x40] sm:$0xf]
    %v115 = vld [vmem:[#allocation2 + $0x44] sm:$0xf]
    %v116 = vld [vmem:[#allocation2 + $0x48] sm:$0xf]
    %v117 = vld [vmem:[#allocation2 + $0x4c] sm:$0xf]
    %v118 = vld [vmem:[#allocation2 + $0x50] sm:$0xf]
    %v119 = vld [vmem:[#allocation2 + $0x54] sm:$0xf]
    %v120 = vld [vmem:[#allocation2 + $0x58] sm:$0xf]
    %v121 = vld [vmem:[#allocation2 + $0x5c] sm:$0xf]
    %v122 = vld [vmem:[#allocation2 + $0x60] sm:$0xf]
    %v123 = vld [vmem:[#allocation2 + $0x64] sm:$0xf]
    %v124 = vld [vmem:[#allocation2 + $0x68] sm:$0xf]
    %v125 = vld [vmem:[#allocation2 + $0x6c] sm:$0xf]
    %v126 = vld [vmem:[#allocation2 + $0x70] sm:$0xf]
    %v127 = vld [vmem:[#allocation2 + $0x74] sm:$0xf]
    %v128 = vld [vmem:[#allocation2 + $0x78] sm:$0xf]
    %v129 = vld [vmem:[#allocation2 + $0x7c] sm:$0xf]
    %v130 = vld [vmem:[%s2] sm:$0x1]
    %v132 = vperm.slane %v130, 0
    %v135 = vunpack.c.l.b16 %v97
    %v136 = vunpack.c.h.b16 %v97
    %v137 = vpack.c.b16 %v135, %v135
    %v138 = vpack.c.b16 %v136, %v136
    %v173 = vunpack.c.l.b16 %v98
    %v174 = vunpack.c.l.b16 %v99
    %v175 = vunpack.c.l.b16 %v100
    %v176 = vunpack.c.l.b16 %v101
    %v177 = vunpack.c.l.b16 %v102
    %v178 = vunpack.c.l.b16 %v103
    %v179 = vunpack.c.l.b16 %v104
    %v180 = vunpack.c.l.b16 %v105
    %v181 = vunpack.c.l.b16 %v106
    %v182 = vunpack.c.l.b16 %v107
    %v183 = vunpack.c.l.b16 %v108
    %v184 = vunpack.c.l.b16 %v109
    %v185 = vunpack.c.l.b16 %v110
    %v186 = vunpack.c.l.b16 %v111
    %v187 = vunpack.c.l.b16 %v112
    %v188 = vunpack.c.l.b16 %v113
    %v189 = vunpack.c.l.b16 %v114
    %v190 = vunpack.c.l.b16 %v115
    %v191 = vunpack.c.l.b16 %v116
    %v192 = vunpack.c.l.b16 %v117
    %v193 = vunpack.c.l.b16 %v118
    %v194 = vunpack.c.l.b16 %v119
    %v195 = vunpack.c.l.b16 %v120
    %v196 = vunpack.c.l.b16 %v121
    %v197 = vunpack.c.l.b16 %v122
    %v198 = vunpack.c.l.b16 %v123
    %v199 = vunpack.c.l.b16 %v124
    %v200 = vunpack.c.l.b16 %v125
    %v201 = vunpack.c.l.b16 %v126
    %v202 = vunpack.c.l.b16 %v127
    %v203 = vunpack.c.l.b16 %v128
    %v204 = vunpack.c.l.b16 %v129
    %v205 = vpack.c.b16 %v174, %v173
    %v206 = vpack.c.b16 %v176, %v175
    %v207 = vpack.c.b16 %v178, %v177
    %v208 = vpack.c.b16 %v180, %v179
    %v209 = vpack.c.b16 %v182, %v181
    %v210 = vpack.c.b16 %v184, %v183
    %v211 = vpack.c.b16 %v186, %v185
    %v212 = vpack.c.b16 %v188, %v187
    %v213 = vpack.c.b16 %v190, %v189
    %v214 = vpack.c.b16 %v192, %v191
    %v215 = vpack.c.b16 %v194, %v193
    %v216 = vpack.c.b16 %v196, %v195
    %v217 = vpack.c.b16 %v198, %v197
    %v218 = vpack.c.b16 %v200, %v199
    %v219 = vpack.c.b16 %v202, %v201
    %v220 = vpack.c.b16 %v204, %v203
    %237 = vmatpush.bf16.msra.mxu0 %v212
    %238 = vmatpush.bf16.msra.mxu0 %v211
    %239 = vmatpush.bf16.msra.mxu0 %v210
    %240 = vmatpush.bf16.msra.mxu0 %v209
    %241 = vmatpush.bf16.msra.mxu0 %v208
    %242 = vmatpush.bf16.msra.mxu0 %v207
    %243 = vmatpush.bf16.msra.mxu0 %v206
    %244 = vmatpush.bf16.msra.mxu0 %v205
    %245 = vmatmul.bf16.gmra.mxu0 %v137
    %v246 = vpop.f32.mrf.mxu0
    %v247 = vadd.f32 %v132, %v246
    %v248 = vpop.f32.mrf.mxu0
    %249 = vdwg.mxu0
    %250 = vmatpush.bf16.msra.mxu0 %v220
    %251 = vmatpush.bf16.msra.mxu0 %v219
    %252 = vmatpush.bf16.msra.mxu0 %v218
    %253 = vmatpush.bf16.msra.mxu0 %v217
    %254 = vmatpush.bf16.msra.mxu0 %v216
    %255 = vmatpush.bf16.msra.mxu0 %v215
    %256 = vmatpush.bf16.msra.mxu0 %v214
    %257 = vmatpush.bf16.msra.mxu0 %v213
    %258 = vmatmul.bf16.gmra.mxu0 %v138
    %v259 = vpop.f32.mrf.mxu0
    %v260 = vadd.f32 %v247, %v259
    %v261 = vpop.f32.mrf.mxu0
    %262 = vdwg.mxu0
    %v263 = vmax.f32 %v260, 0.0
    %v264 = vpack.c.bf16 %v263, %v263
    %v265 = vld [vmem:[%s3] sm:$0xf]
    %v266 = vld [vmem:[%s3 + $0x4] sm:$0xf]
    %v267 = vld [vmem:[%s3 + $0x8] sm:$0xf]
    %v268 = vld [vmem:[%s3 + $0xc] sm:$0xf]
    %v269 = vld [vmem:[%s3 + $0x10] sm:$0xf]
    %v270 = vld [vmem:[%s3 + $0x14] sm:$0xf]
    %v271 = vld [vmem:[%s3 + $0x18] sm:$0xf]
    %v272 = vld [vmem:[%s3 + $0x1c] sm:$0xf]
    %v273 = vld [vmem:[%s3 + $0x20] sm:$0xf]
    %v274 = vld [vmem:[%s3 + $0x24] sm:$0xf]
    %v275 = vld [vmem:[%s3 + $0x28] sm:$0xf]
    %v276 = vld [vmem:[%s3 + $0x2c] sm:$0xf]
    %v277 = vld [vmem:[%s3 + $0x30] sm:$0xf]
    %v278 = vld [vmem:[%s3 + $0x34] sm:$0xf]
    %v279 = vld [vmem:[%s3 + $0x38] sm:$0xf]
    %v280 = vld [vmem:[%s3 + $0x3c] sm:$0xf]
    %v281 = vld [vmem:[#allocation5] sm:$0x1]
    %v283 = vperm.slane %v281, 0
    %v301 = vunpack.c.l.b16 %v265
    %v302 = vunpack.c.l.b16 %v266
    %v303 = vunpack.c.l.b16 %v267
    %v304 = vunpack.c.l.b16 %v268
    %v305 = vunpack.c.l.b16 %v269
    %v306 = vunpack.c.l.b16 %v270
    %v307 = vunpack.c.l.b16 %v271
    %v308 = vunpack.c.l.b16 %v272
    %v309 = vunpack.c.l.b16 %v273
    %v310 = vunpack.c.l.b16 %v274
    %v311 = vunpack.c.l.b16 %v275
    %v312 = vunpack.c.l.b16 %v276
    %v313 = vunpack.c.l.b16 %v277
    %v314 = vunpack.c.l.b16 %v278
    %v315 = vunpack.c.l.b16 %v279
    %v316 = vunpack.c.l.b16 %v280
    %v317 = vpack.c.b16 %v302, %v301
    %v318 = vpack.c.b16 %v304, %v303
    %v319 = vpack.c.b16 %v306, %v305
    %v320 = vpack.c.b16 %v308, %v307
    %v321 = vpack.c.b16 %v310, %v309
    %v322 = vpack.c.b16 %v312, %v311
    %v323 = vpack.c.b16 %v314, %v313
    %v324 = vpack.c.b16 %v316, %v315
    %333 = vmatpush.bf16.msra.mxu0 %v324
    %334 = vmatpush.bf16.msra.mxu0 %v323
    %335 = vmatpush.bf16.msra.mxu0 %v322
    %336 = vmatpush.bf16.msra.mxu0 %v321
    %337 = vmatpush.bf16.msra.mxu0 %v320
    %338 = vmatpush.bf16.msra.mxu0 %v319
    %339 = vmatpush.bf16.msra.mxu0 %v318
    %340 = vmatpush.bf16.msra.mxu0 %v317
    %341 = vmatmul.bf16.gmra.mxu0 %v264
    %v342 = vpop.f32.mrf.mxu0
    %v343 = vadd.f32 %v283, %v342
    %v344 = vpop.f32.mrf.mxu0
    %345 = vdwg.mxu0
    %v346 = vmax.f32 %v343, 0.0
    %v347 = vpack.c.bf16 %v346, %v346
    %v348 = vld [vmem:[%s5] sm:$0xf]
    %v349 = vld [vmem:[%s5 + $0x4] sm:$0xf]
    %v350 = vld [vmem:[%s5 + $0x8] sm:$0xf]
    %v351 = vld [vmem:[%s5 + $0xc] sm:$0xf]
    %v352 = vld [vmem:[%s5 + $0x10] sm:$0xf]
    %v353 = vld [vmem:[%s5 + $0x14] sm:$0xf]
    %v354 = vld [vmem:[%s5 + $0x18] sm:$0xf]
    %v355 = vld [vmem:[%s5 + $0x1c] sm:$0xf]
    %v356 = vld [vmem:[%s6] sm:$0x1]
    %v358 = vperm.slane %v356, 0
    %v368 = vunpack.c.l.b16 %v348
    %v369 = vunpack.c.l.b16 %v349
    %v370 = vunpack.c.l.b16 %v350
    %v371 = vunpack.c.l.b16 %v351
    %v372 = vunpack.c.l.b16 %v352
    %v373 = vunpack.c.l.b16 %v353
    %v374 = vunpack.c.l.b16 %v354
    %v375 = vunpack.c.l.b16 %v355
    %v376 = vpack.c.b16 %v369, %v368
    %v377 = vpack.c.b16 %v371, %v370
    %v378 = vpack.c.b16 %v373, %v372
    %v379 = vpack.c.b16 %v375, %v374
    %vm384 = vcmask 523264
    %v386 = vsel %vm384, %v347, 0
    %388 = vmatpush.bf16.msra.mxu0 0
    %389 = vmatpush.bf16.msra.mxu0 0
    %390 = vmatpush.bf16.msra.mxu0 0
    %391 = vmatpush.bf16.msra.mxu0 0
    %392 = vmatpush.bf16.msra.mxu0 %v379
    %393 = vmatpush.bf16.msra.mxu0 %v378
    %394 = vmatpush.bf16.msra.mxu0 %v377
    %395 = vmatpush.bf16.msra.mxu0 %v376
    %396 = vmatmul.bf16.gmra.mxu0 %v386
    %v397 = vpop.f32.mrf.mxu0
    %v398 = vadd.f32 %v358, %v397
    %v399 = vpop.f32.mrf.mxu0
    %400 = vdwg.mxu0
    %v401 = vmul.f32 %v398, 0.5
    %v402 = vmul.f32 %v401, 1.442695
    %v403 = vpow.pop %v402
    %v404 = vld [vmem:[%s13] sm:$0xff]
    %406 = vrot.lane.b32.xlu0 %v403, 96
    %v407 = vpop.permute.xlu0 %406
    %v409 = vmul.f32 %v404, %v407
    %v410 = vadd.f32 %v398, %v409
    %v411 = vpack.c.bf16 %v410, %v410
    %v412 = vld [vmem:[%s7] sm:$0xf]
    %v413 = vld [vmem:[%s7 + $0x4] sm:$0xf]
    %v414 = vld [vmem:[%s7 + $0x8] sm:$0xf]
    %v415 = vld [vmem:[%s7 + $0xc] sm:$0xf]
    %v416 = vld [vmem:[%s8] sm:$0x1]
    %v418 = vperm.slane %v416, 0
    %v424 = vunpack.c.l.b16 %v412
    %v425 = vunpack.c.l.b16 %v413
    %v426 = vunpack.c.l.b16 %v414
    %v427 = vunpack.c.l.b16 %v415
    %v428 = vpack.c.b16 %v425, %v424
    %v429 = vpack.c.b16 %v427, %v426
    %vm432 = vcmask 261120
    %v434 = vsel %vm432, %v411, 0
    %436 = vmatpush.bf16.msra.mxu0 0
    %437 = vmatpush.bf16.msra.mxu0 0
    %438 = vmatpush.bf16.msra.mxu0 0
    %439 = vmatpush.bf16.msra.mxu0 0
    %440 = vmatpush.bf16.msra.mxu0 0
    %441 = vmatpush.bf16.msra.mxu0 0
    %442 = vmatpush.bf16.msra.mxu0 %v429
    %443 = vmatpush.bf16.msra.mxu0 %v428
    %444 = vmatmul.bf16.gmra.mxu0 %v434
    %v445 = vpop.f32.mrf.mxu0
    %v446 = vadd.f32 %v418, %v445
    %v447 = vpop.f32.mrf.mxu0
    %448 = vdwg.mxu0
    %v449 = vmax.f32 %v446, 0.0
    %v450 = vpack.c.bf16 %v449, %v449
    %v451 = vld [vmem:[%s9] sm:$0xf]
    %v452 = vld [vmem:[%s9 + $0x4] sm:$0xf]
    %v453 = vld [vmem:[%s9 + $0x8] sm:$0xf]
    %v454 = vld [vmem:[%s9 + $0xc] sm:$0xf]
    %v455 = vld [vmem:[%s9 + $0x10] sm:$0xf]
    %v456 = vld [vmem:[%s9 + $0x14] sm:$0xf]
    %v457 = vld [vmem:[%s9 + $0x18] sm:$0xf]
    %v458 = vld [vmem:[%s9 + $0x1c] sm:$0xf]
    %v459 = vld [vmem:[%s10] sm:$0x1]
    %v461 = vperm.slane %v459, 0
    %v471 = vunpack.c.l.b16 %v451
    %v472 = vunpack.c.l.b16 %v452
    %v473 = vunpack.c.l.b16 %v453
    %v474 = vunpack.c.l.b16 %v454
    %v475 = vunpack.c.l.b16 %v455
    %v476 = vunpack.c.l.b16 %v456
    %v477 = vunpack.c.l.b16 %v457
    %v478 = vunpack.c.l.b16 %v458
    %v479 = vpack.c.b16 %v472, %v471
    %v480 = vpack.c.b16 %v474, %v473
    %v481 = vpack.c.b16 %v476, %v475
    %v482 = vpack.c.b16 %v478, %v477
    %v488 = vsel %vm384, %v450, 0
    %490 = vmatpush.bf16.msra.mxu0 0
    %491 = vmatpush.bf16.msra.mxu0 0
    %492 = vmatpush.bf16.msra.mxu0 0
    %493 = vmatpush.bf16.msra.mxu0 0
    %494 = vmatpush.bf16.msra.mxu0 %v482
    %495 = vmatpush.bf16.msra.mxu0 %v481
    %496 = vmatpush.bf16.msra.mxu0 %v480
    %497 = vmatpush.bf16.msra.mxu0 %v479
    %498 = vmatmul.bf16.gmra.mxu0 %v488
    %v499 = vpop.f32.mrf.mxu0
    %v500 = vadd.f32 %v461, %v499
    %v501 = vpop.f32.mrf.mxu0
    %502 = vdwg.mxu0
    %v503 = vmax.f32 %v500, 0.0
    %v504 = vpack.c.bf16 %v503, %v503
    %v505 = vld [vmem:[#allocation7] sm:$0xff]
    %v506 = vld [vmem:[#allocation7 + $0x8] sm:$0xff]
    %v507 = vld [vmem:[#allocation7 + $0x10] sm:$0xff]
    %v508 = vld [vmem:[#allocation7 + $0x18] sm:$0xff]
    %v509 = vld [vmem:[#allocation7 + $0x20] sm:$0xff]
    %v510 = vld [vmem:[#allocation7 + $0x28] sm:$0xff]
    %v511 = vld [vmem:[#allocation7 + $0x30] sm:$0xff]
    %v512 = vld [vmem:[#allocation7 + $0x38] sm:$0xff]
    %v513 = vld [vmem:[#allocation7 + $0x40] sm:$0xff]
    %v514 = vld [vmem:[#allocation7 + $0x48] sm:$0xff]
    %v515 = vld [vmem:[#allocation7 + $0x50] sm:$0xff]
    %v516 = vld [vmem:[#allocation7 + $0x58] sm:$0xff]
    %v517 = vld [vmem:[#allocation7 + $0x60] sm:$0xff]
    %v518 = vld [vmem:[#allocation7 + $0x68] sm:$0xff]
    %v519 = vld [vmem:[#allocation7 + $0x70] sm:$0xff]
    %v520 = vld [vmem:[#allocation7 + $0x78] sm:$0xff]
    %v521 = vld [vmem:[%s12] sm:$0x3]
    %v523 = vperm.slane %v521, 0
    %v524 = vperm.slane %v521, 1
    %v543 = vunpack.c.l.b16 %v505
    %v544 = vunpack.c.h.b16 %v505
    %v545 = vunpack.c.l.b16 %v506
    %v546 = vunpack.c.h.b16 %v506
    %v547 = vunpack.c.l.b16 %v507
    %v548 = vunpack.c.h.b16 %v507
    %v549 = vunpack.c.l.b16 %v508
    %v550 = vunpack.c.h.b16 %v508
    %v551 = vunpack.c.l.b16 %v509
    %v552 = vunpack.c.h.b16 %v509
    %v553 = vunpack.c.l.b16 %v510
    %v554 = vunpack.c.h.b16 %v510
    %v555 = vunpack.c.l.b16 %v511
    %v556 = vunpack.c.h.b16 %v511
    %v557 = vunpack.c.l.b16 %v512
    %v558 = vunpack.c.h.b16 %v512
    %v559 = vunpack.c.l.b16 %v513
    %v560 = vunpack.c.h.b16 %v513
    %v561 = vunpack.c.l.b16 %v514
    %v562 = vunpack.c.h.b16 %v514
    %v563 = vunpack.c.l.b16 %v515
    %v564 = vunpack.c.h.b16 %v515
    %v565 = vunpack.c.l.b16 %v516
    %v566 = vunpack.c.h.b16 %v516
    %v567 = vunpack.c.l.b16 %v517
    %v568 = vunpack.c.h.b16 %v517
    %v569 = vunpack.c.l.b16 %v518
    %v570 = vunpack.c.h.b16 %v518
    %v571 = vunpack.c.l.b16 %v519
    %v572 = vunpack.c.h.b16 %v519
    %v573 = vunpack.c.l.b16 %v520
    %v574 = vunpack.c.h.b16 %v520
    %v575 = vpack.c.b16 %v545, %v543
    %v576 = vpack.c.b16 %v546, %v544
    %v577 = vpack.c.b16 %v549, %v547
    %v578 = vpack.c.b16 %v550, %v548
    %v579 = vpack.c.b16 %v553, %v551
    %v580 = vpack.c.b16 %v554, %v552
    %v581 = vpack.c.b16 %v557, %v555
    %v582 = vpack.c.b16 %v558, %v556
    %v583 = vpack.c.b16 %v561, %v559
    %v584 = vpack.c.b16 %v562, %v560
    %v585 = vpack.c.b16 %v565, %v563
    %v586 = vpack.c.b16 %v566, %v564
    %v587 = vpack.c.b16 %v569, %v567
    %v588 = vpack.c.b16 %v570, %v568
    %v589 = vpack.c.b16 %v573, %v571
    %v590 = vpack.c.b16 %v574, %v572
    %607 = vmatpush.bf16.msra.mxu0 %v589
    %608 = vmatpush.bf16.msra.mxu0 %v587
    %609 = vmatpush.bf16.msra.mxu0 %v585
    %610 = vmatpush.bf16.msra.mxu0 %v583
    %611 = vmatpush.bf16.msra.mxu0 %v581
    %612 = vmatpush.bf16.msra.mxu0 %v579
    %613 = vmatpush.bf16.msra.mxu0 %v577
    %614 = vmatpush.bf16.msra.mxu0 %v575
    %615 = vmatmul.bf16.gmra.mxu0 %v504
    %v616 = vpop.f32.mrf.mxu0
    %v617 = vadd.f32 %v523, %v616
    %v618 = vpop.f32.mrf.mxu0
    %619 = vdwg.mxu0
    %620 = vmatpush.bf16.msra.mxu0 %v590
    %621 = vmatpush.bf16.msra.mxu0 %v588
    %622 = vmatpush.bf16.msra.mxu0 %v586
    %623 = vmatpush.bf16.msra.mxu0 %v584
    %624 = vmatpush.bf16.msra.mxu0 %v582
    %625 = vmatpush.bf16.msra.mxu0 %v580
    %626 = vmatpush.bf16.msra.mxu0 %v578
    %627 = vmatpush.bf16.msra.mxu0 %v576
    %628 = vmatmul.bf16.gmra.mxu0 %v504
    %v629 = vpop.f32.mrf.mxu0
    %v630 = vadd.f32 %v524, %v629
    %v631 = vpop.f32.mrf.mxu0
    %632 = vdwg.mxu0
    %633 = vst [vmem:[#allocation8] sm:$0xff] %v617
    %634 = vst [vmem:[#allocation8 + $0x8] sm:$0xff] %v630
    %635 = vst [vmem:[#allocation9] sm:$0xff] %v398
    // Predicated region
    $region70: #{tpu_custom_call.1} parent=1 // pred_check
      _
    $region71: #{tpu_custom_call.1} parent=1 // pred_check_branch
      %637 = sbr.rel (0) target = $region73
    $region72: #{tpu_custom_call.1} parent=1 // pred_region
      %639 = vsyncadd [#allocation4], 0
      %s641 = sshll.u32 [#allocation8], 4
      %s642 = int_to_ptr.vmem [resolvable:$true] %s641
      %s643 = sshll.u32 %s14, 4
      %s644 = int_to_ptr.hbm [resolvable:$true] %s643
      %646 = dma.vmem_to_hbm [thread:$0]  %s642, 256, %s644, [#allocation4]
    $region73: #{tpu_custom_call.1} parent=1 // pred_fallthru
      _
    // Predicated region
    $region74: #{tpu_custom_call.1} parent=1 // pred_check
      _
    $region75: #{tpu_custom_call.1} parent=1 // pred_check_branch
      %648 = sbr.rel (0) target = $region77
    $region76: #{tpu_custom_call.1} parent=1 // pred_region
      %650 = vsyncadd [#allocation10], 0
      %s652 = sshll.u32 [#allocation9], 4
      %s653 = int_to_ptr.vmem [resolvable:$true] %s652
      %s654 = sshll.u32 %s15, 4
      %s655 = int_to_ptr.hbm [resolvable:$true] %s654
      %657 = dma.vmem_to_hbm [thread:$0]  %s653, 128, %s655, [#allocation10]
    $region77: #{tpu_custom_call.1} parent=1 // pred_fallthru
      _
    // Predicated region
    $region78: #{tpu_custom_call.1} parent=1 // pred_check
      _
    $region79: #{tpu_custom_call.1} parent=1 // pred_check_branch
      %659 = sbr.rel (0) target = $region81
    $region80: #{tpu_custom_call.1} parent=1 // pred_region
      %661 = dma.done [#allocation4], 256
    $region81: #{tpu_custom_call.1} parent=1 // pred_fallthru
      _
    // Predicated region
    $region82: #{tpu_custom_call.1} parent=1 // pred_check
      _
    $region83: #{tpu_custom_call.1} parent=1 // pred_check_branch
      %663 = sbr.rel (0) target = $region85
    $region84: #{tpu_custom_call.1} parent=1 // pred_region
      %665 = dma.done [#allocation10], 128
    $region85: #{tpu_custom_call.1} parent=1 // pred_fallthru
      _
    %666 = vsyncpa [#allocation3], 1
    %667 = vsyncpa [#allocation6], 1
    %668 = vsyncpa [#allocation4], 1
    %669 = vsyncpa [#allocation10], 1

</llo_original>
